<compile_context>
chip_gen: v7x
topology: tpu7x:2x2x1
jax: 0.10.0
libtpu: 0.0.40
codegen_flags: <defaults>
</compile_context>

<pallas_src>
import math
import functools

import jax
import jax.numpy as jnp
from jax.experimental import pallas as pl
from jax.experimental.pallas import tpu as pltpu


def _round_up(v, m):
    return ((v + m - 1) // m) * m


def highway_kernel(x_ref, wcat_ref, bcat_ref, o_ref):
    # One grid step processes a [TM, Hp] row tile.  wcat is [Hp, 2*Hp] with the
    # hidden projection in columns [:Hp] and the gate projection in [Hp:].
    hp = x_ref.shape[-1]
    x = x_ref[...]                                      # (TM, Hp), compute dtype

    # Single fused MXU matmul with f32 accumulation.
    hg = jnp.dot(x, wcat_ref[...], preferred_element_type=jnp.float32)
    hg = hg + bcat_ref[...]                             # f32 bias broadcast over rows

    x_t = jnp.maximum(hg[:, :hp], 0.0)                  # hidden branch: relu
    t = jax.nn.sigmoid(hg[:, hp:])                      # transform gate

    xf = x.astype(jnp.float32)                          # blend in f32
    o_ref[...] = (xf * (1.0 - t) + x_t * t).astype(o_ref.dtype)


@functools.partial(
    jax.jit,
    static_argnames=("tile_m", "compute_dtype", "single_buffer_weights"))
def _highway_forward_impl(x, w_hidden, b_hidden, w_gate, b_gate, *,
                          tile_m, compute_dtype, single_buffer_weights):
    n, h = x.shape
    out_dtype = x.dtype

    # ---- Pad hidden dim to a lane-dense multiple of 128.  The extra rows /
    # columns of W and b are zero, so padded outputs are inert and sliced away.
    hp = _round_up(h, 128)

    def pad2(a, r, c):
        return jnp.pad(a, ((0, r - a.shape[0]), (0, c - a.shape[1])))

    w_h = pad2(w_hidden.astype(compute_dtype), hp, hp)
    w_g = pad2(w_gate.astype(compute_dtype), hp, hp)
    w_cat = jnp.concatenate([w_h, w_g], axis=1)                     # (Hp, 2*Hp)

    b_h = jnp.pad(b_hidden.astype(jnp.float32), (0, hp - h))
    b_g = jnp.pad(b_gate.astype(jnp.float32), (0, hp - h))
    b_cat = jnp.concatenate([b_h, b_g], axis=0).reshape(1, 2 * hp)  # f32, (1, 2*Hp)

    # ---- Row tiling: clamp the requested tile to the (sublane-rounded) batch
    # and zero-pad the batch so the grid divides evenly (no divisibility assert).
    tm = min(tile_m, _round_up(n, 8))
    n_pad = _round_up(n, tm)
    x_c = x.astype(compute_dtype)
    if n_pad != n or hp != h:
        x_c = jnp.pad(x_c, ((0, n_pad - n), (0, hp - h)))
    grid = (n_pad // tm,)

    # ---- Explicit VMEM budget: double-buffered x/out tiles + resident fused
    # weight/bias + headroom for the f32 [TM, 2*Hp] intermediate.
    csz = jnp.dtype(compute_dtype).itemsize
    osz = jnp.dtype(out_dtype).itemsize
    wbuf = 1 if single_buffer_weights else 2
    vmem_needed = (2 * tm * hp * csz                         # x tile (2 bufs)
                   + 2 * tm * hp * osz                       # out tile (2 bufs)
                   + wbuf * (hp * 2 * hp * csz + 2 * hp * 4) # W_cat + b_cat
                   + 2 * tm * 2 * hp * 4)                    # f32 intermediate
    vmem_limit = int(min(max(2 * vmem_needed, 32 * 1024 * 1024),
                         64 * 1024 * 1024))                  # stay within v7x 64 MiB

    weight_kwargs = {}
    if single_buffer_weights and hasattr(pl, "Buffered"):
        # Constant index_map => single-buffer the resident weights/biases.
        weight_kwargs["pipeline_mode"] = pl.Buffered(1)

    out = pl.pallas_call(
        highway_kernel,
        out_shape=jax.ShapeDtypeStruct((n_pad, hp), out_dtype),
        grid_spec=pltpu.PrefetchScalarGridSpec(
            num_scalar_prefetch=0,
            grid=grid,
            in_specs=[
                pl.BlockSpec((tm, hp), lambda i: (i, 0)),                    # x row tile
                pl.BlockSpec((hp, 2 * hp), lambda i: (0, 0), **weight_kwargs),  # fused W
                pl.BlockSpec((1, 2 * hp), lambda i: (0, 0), **weight_kwargs),   # fused b
            ],
            out_specs=pl.BlockSpec((tm, hp), lambda i: (i, 0)),
        ),
        compiler_params=pltpu.CompilerParams(
            dimension_semantics=("parallel",),
            vmem_limit_bytes=vmem_limit,
        ),
    )(x_c, w_cat, b_cat)

    if n_pad != n or hp != h:
        out = out[:n, :h]
    return out


def highway_forward(x, w_hidden, b_hidden, w_gate, b_gate, *,
                    tile_m=256, compute_dtype=jnp.bfloat16):
    """Highway layer forward.  Weights are stored [H_in, H_out] (transpose of
    torch nn.Linear's [out, in]) so the kernel computes x @ W on the MXU."""
    try:
        return _highway_forward_impl(
            x, w_hidden, b_hidden, w_gate, b_gate,
            tile_m=tile_m, compute_dtype=compute_dtype,
            single_buffer_weights=True)
    except Exception:
        # Some jax builds may reject pl.Buffered(1) on the main pallas_call
        # pipeline; retry with the default double-buffered weight specs.
        return _highway_forward_impl(
            x, w_hidden, b_hidden, w_gate, b_gate,
            tile_m=tile_m, compute_dtype=compute_dtype,
            single_buffer_weights=False)


def init_params(key, hidden_size, dtype=jnp.float32):
    """Deterministic init mirroring the PyTorch module's _init_():
    xavier_uniform(gain=sqrt(2)) for weights, uniform(-std, std) for biases."""
    k1, k2, k3, k4 = jax.random.split(key, 4)
    bound_w = math.sqrt(2.0) * math.sqrt(6.0 / (hidden_size + hidden_size))
    std = 1.0 / math.sqrt(hidden_size)
    # Stored as [H_in, H_out] (transpose of torch Linear's [out, in]).
    w_hidden = jax.random.uniform(k1, (hidden_size, hidden_size), dtype,
                                  minval=-bound_w, maxval=bound_w)
    b_hidden = jax.random.uniform(k2, (hidden_size,), dtype,
                                  minval=-std, maxval=std)
    w_gate = jax.random.uniform(k3, (hidden_size, hidden_size), dtype,
                                minval=-bound_w, maxval=bound_w)
    b_gate = jax.random.uniform(k4, (hidden_size,), dtype,
                                minval=-std, maxval=std)
    return w_hidden, b_hidden, w_gate, b_gate


def highway_reference(x, w_hidden, b_hidden, w_gate, b_gate,
                      compute_dtype=jnp.float32):
    """Pure-JAX reference matching the PyTorch forward.  With a low-precision
    compute_dtype it emulates the kernel's bf16 matmul inputs + f32 accum."""
    xc = x.astype(compute_dtype)
    h = jnp.dot(xc, w_hidden.astype(compute_dtype),
                preferred_element_type=jnp.float32) + b_hidden
    g = jnp.dot(xc, w_gate.astype(compute_dtype),
                preferred_element_type=jnp.float32) + b_gate
    x_t = jax.nn.relu(h)
    t = jax.nn.sigmoid(g)
    xf = xc.astype(jnp.float32)
    return (xf * (1.0 - t) + x_t * t).astype(x.dtype)


if __name__ == "__main__":
    key = jax.random.PRNGKey(0)
    k_param, k_x = jax.random.split(key)

    batch = 16
    hidden_size = 32

    w_hidden, b_hidden, w_gate, b_gate = init_params(k_param, hidden_size)
    x = jax.random.normal(k_x, (batch, hidden_size), jnp.float32)

    # f32 compute path: must match the PyTorch-equivalent reference tightly.
    out_f32 = highway_forward(x, w_hidden, b_hidden, w_gate, b_gate,
                              tile_m=256, compute_dtype=jnp.float32)
    out_f32 = jax.block_until_ready(out_f32)
    ref_f32 = highway_reference(x, w_hidden, b_hidden, w_gate, b_gate)
    assert out_f32.shape == (batch, hidden_size)
    assert jnp.allclose(out_f32, ref_f32, atol=1e-5, rtol=1e-5), \
        "f32 mismatch vs reference"

    # bf16 compute path (default, MXU-native): compare against a reference
    # using the same bf16 matmul inputs with f32 accumulation, plus a loose
    # sanity check against the pure-f32 reference.
    out_bf16 = highway_forward(x, w_hidden, b_hidden, w_gate, b_gate)
    out_bf16 = jax.block_until_ready(out_bf16)
    ref_bf16 = highway_reference(x, w_hidden, b_hidden, w_gate, b_gate,
                                 compute_dtype=jnp.bfloat16)
    assert jnp.allclose(out_bf16, ref_bf16, atol=2e-2, rtol=2e-2), \
        "bf16 mismatch vs bf16 reference"
    assert jnp.allclose(out_bf16, ref_f32, atol=5e-2, rtol=5e-2), \
        "bf16 drifted too far from f32 reference"

    print("KERNEL_OK")
</pallas_src>

<mosaic_0001>
module attributes {stable_mosaic.version = 11 : i64} {
  func.func @highway_kernel(%arg0: i32, %arg1: memref<16x128xf32, #tpu.memory_space<vmem>>, %arg2: memref<128x256xf32, #tpu.memory_space<vmem>>, %arg3: memref<1x256xf32, #tpu.memory_space<vmem>>, %arg4: memref<16x128xf32, #tpu.memory_space<vmem>>) attributes {dimension_semantics = [#tpu.dimension_semantics<parallel>], iteration_bounds = array<i64: 1>, scalar_prefetch = 0 : i64, scratch_operands = 0 : i64, tpu.core_type = #tpu.core_type<tc>, window_params = [{transform_indices = @transform_0, window_bounds = array<i64: 16, 128>}, {pipeline_mode = #tpu.pipeline_mode<synchronous>, transform_indices = @transform_1, window_bounds = array<i64: 128, 256>}, {pipeline_mode = #tpu.pipeline_mode<synchronous>, transform_indices = @transform_2, window_bounds = array<i64: 1, 256>}, {transform_indices = @transform_3, window_bounds = array<i64: 16, 128>}]} {
    %c0 = arith.constant 0 : index
    %c0_0 = arith.constant 0 : index
    %0 = vector.load %arg1[%c0, %c0_0] : memref<16x128xf32, #tpu.memory_space<vmem>>, vector<16x128xf32>
    %c0_1 = arith.constant 0 : index
    %c0_2 = arith.constant 0 : index
    %1 = vector.load %arg2[%c0_1, %c0_2] : memref<128x256xf32, #tpu.memory_space<vmem>>, vector<128x256xf32>
    %cst = arith.constant dense<0.000000e+00> : vector<16x256xf32>
    %2 = tpu.matmul %0, %1, %cst {dimension_numbers = #tpu.dot_dimension_numbers<[1], [0], [0], [1], [0, 0, 1, 1], [], []>} : vector<16x128xf32>, vector<128x256xf32>, vector<16x256xf32> -> vector<16x256xf32>
    %c0_3 = arith.constant 0 : index
    %c0_4 = arith.constant 0 : index
    %3 = vector.load %arg3[%c0_3, %c0_4] : memref<1x256xf32, #tpu.memory_space<vmem>>, vector<1x256xf32>
    %4 = vector.broadcast %3 : vector<1x256xf32> to vector<16x256xf32>
    %5 = arith.addf %2, %4 : vector<16x256xf32>
    %6 = vector.extract_strided_slice %5 {offsets = [0, 0], sizes = [16, 128], strides = [1, 1]} : vector<16x256xf32> to vector<16x128xf32>
    %cst_5 = arith.constant 0.000000e+00 : f32
    %7 = vector.broadcast %cst_5 : f32 to vector<16x128xf32>
    %8 = arith.maximumf %6, %7 : vector<16x128xf32>
    %9 = vector.extract_strided_slice %5 {offsets = [0, 128], sizes = [16, 128], strides = [1, 1]} : vector<16x256xf32> to vector<16x128xf32>
    %10 = arith.negf %9 : vector<16x128xf32>
    %11 = math.exp %10 : vector<16x128xf32>
    %cst_6 = arith.constant 1.000000e+00 : f32
    %12 = vector.broadcast %cst_6 : f32 to vector<16x128xf32>
    %13 = arith.addf %12, %11 : vector<16x128xf32>
    %14 = arith.divf %12, %13 : vector<16x128xf32>
    %cst_7 = arith.constant 1.000000e+00 : f32
    %15 = vector.broadcast %cst_7 : f32 to vector<16x128xf32>
    %16 = arith.subf %15, %14 : vector<16x128xf32>
    %17 = arith.mulf %0, %16 : vector<16x128xf32>
    %18 = arith.mulf %8, %14 : vector<16x128xf32>
    %19 = arith.addf %17, %18 : vector<16x128xf32>
    %c0_8 = arith.constant 0 : index
    %c0_9 = arith.constant 0 : index
    %20 = vector.load %arg4[%c0_8, %c0_9] : memref<16x128xf32, #tpu.memory_space<vmem>>, vector<16x128xf32>
    tpu.vector_store %arg4[%c0_8, %c0_9], %19 {strides = array<i32>} : memref<16x128xf32, #tpu.memory_space<vmem>>, vector<16x128xf32>,
    return
  }
  func.func @transform_0(%arg0: i32) -> (i32, i32) {
    %c0_i32 = arith.constant 0 : i32
    %c0_i32_0 = arith.constant 0 : i32
    return %arg0, %c0_i32 : i32, i32
  }
  func.func @transform_1(%arg0: i32) -> (i32, i32) {
    %c0_i32 = arith.constant 0 : i32
    %c0_i32_0 = arith.constant 0 : i32
    %c0_i32_1 = arith.constant 0 : i32
    return %c0_i32, %c0_i32_0 : i32, i32
  }
  func.func @transform_2(%arg0: i32) -> (i32, i32) {
    %c0_i32 = arith.constant 0 : i32
    %c0_i32_0 = arith.constant 0 : i32
    %c0_i32_1 = arith.constant 0 : i32
    return %c0_i32, %c0_i32_0 : i32, i32
  }
  func.func @transform_3(%arg0: i32) -> (i32, i32) {
    %c0_i32 = arith.constant 0 : i32
    %c0_i32_0 = arith.constant 0 : i32
    return %arg0, %c0_i32 : i32, i32
  }
}

module attributes {stable_mosaic.version = 11 : i64} {
  func.func @highway_kernel(%arg0: i32, %arg1: memref<16x128xf32, #tpu.memory_space<vmem>>, %arg2: memref<128x256xf32, #tpu.memory_space<vmem>>, %arg3: memref<1x256xf32, #tpu.memory_space<vmem>>, %arg4: memref<16x128xf32, #tpu.memory_space<vmem>>) attributes {dimension_semantics = [#tpu.dimension_semantics<parallel>], iteration_bounds = array<i64: 1>, scalar_prefetch = 0 : i64, scratch_operands = 0 : i64, tpu.core_type = #tpu.core_type<tc>, window_params = [{transform_indices = @transform_0, window_bounds = array<i64: 16, 128>}, {pipeline_mode = #tpu.pipeline_mode<synchronous>, transform_indices = @transform_1, window_bounds = array<i64: 128, 256>}, {pipeline_mode = #tpu.pipeline_mode<synchronous>, transform_indices = @transform_2, window_bounds = array<i64: 1, 256>}, {transform_indices = @transform_3, window_bounds = array<i64: 16, 128>}]} {
    %c0 = arith.constant 0 : index
    %c0_0 = arith.constant 0 : index
    %0 = vector.load %arg1[%c0, %c0_0] : memref<16x128xf32, #tpu.memory_space<vmem>>, vector<16x128xf32>
    %c0_1 = arith.constant 0 : index
    %c0_2 = arith.constant 0 : index
    %1 = vector.load %arg2[%c0_1, %c0_2] : memref<128x256xf32, #tpu.memory_space<vmem>>, vector<128x256xf32>
    %cst = arith.constant dense<0.000000e+00> : vector<16x256xf32>
    %2 = tpu.matmul %0, %1, %cst {dimension_numbers = #tpu.dot_dimension_numbers<[1], [0], [0], [1], [0, 0, 1, 1], [], []>} : vector<16x128xf32>, vector<128x256xf32>, vector<16x256xf32> -> vector<16x256xf32>
    %c0_3 = arith.constant 0 : index
    %c0_4 = arith.constant 0 : index
    %3 = vector.load %arg3[%c0_3, %c0_4] : memref<1x256xf32, #tpu.memory_space<vmem>>, vector<1x256xf32>
    %4 = vector.broadcast %3 : vector<1x256xf32> to vector<16x256xf32>
    %5 = arith.addf %2, %4 : vector<16x256xf32>
    %6 = vector.extract_strided_slice %5 {offsets = [0, 0], sizes = [16, 128], strides = [1, 1]} : vector<16x256xf32> to vector<16x128xf32>
    %cst_5 = arith.constant 0.000000e+00 : f32
    %7 = vector.broadcast %cst_5 : f32 to vector<16x128xf32>
    %8 = arith.maximumf %6, %7 : vector<16x128xf32>
    %9 = vector.extract_strided_slice %5 {offsets = [0, 128], sizes = [16, 128], strides = [1, 1]} : vector<16x256xf32> to vector<16x128xf32>
    %10 = arith.negf %9 : vector<16x128xf32>
    %11 = math.exp %10 : vector<16x128xf32>
    %cst_6 = arith.constant 1.000000e+00 : f32
    %12 = vector.broadcast %cst_6 : f32 to vector<16x128xf32>
    %13 = arith.addf %12, %11 : vector<16x128xf32>
    %14 = arith.divf %12, %13 : vector<16x128xf32>
    %cst_7 = arith.constant 1.000000e+00 : f32
    %15 = vector.broadcast %cst_7 : f32 to vector<16x128xf32>
    %16 = arith.subf %15, %14 : vector<16x128xf32>
    %17 = arith.mulf %0, %16 : vector<16x128xf32>
    %18 = arith.mulf %8, %14 : vector<16x128xf32>
    %19 = arith.addf %17, %18 : vector<16x128xf32>
    %c0_8 = arith.constant 0 : index
    %c0_9 = arith.constant 0 : index
    %20 = vector.load %arg4[%c0_8, %c0_9] : memref<16x128xf32, #tpu.memory_space<vmem>>, vector<16x128xf32>
    tpu.vector_store %arg4[%c0_8, %c0_9], %19 {strides = array<i32>} : memref<16x128xf32, #tpu.memory_space<vmem>>, vector<16x128xf32>,
    return
  }
  func.func @transform_0(%arg0: i32) -> (i32, i32) {
    %c0_i32 = arith.constant 0 : i32
    %c0_i32_0 = arith.constant 0 : i32
    return %arg0, %c0_i32 : i32, i32
  }
  func.func @transform_1(%arg0: i32) -> (i32, i32) {
    %c0_i32 = arith.constant 0 : i32
    %c0_i32_0 = arith.constant 0 : i32
    %c0_i32_1 = arith.constant 0 : i32
    return %c0_i32, %c0_i32_0 : i32, i32
  }
  func.func @transform_2(%arg0: i32) -> (i32, i32) {
    %c0_i32 = arith.constant 0 : i32
    %c0_i32_0 = arith.constant 0 : i32
    %c0_i32_1 = arith.constant 0 : i32
    return %c0_i32, %c0_i32_0 : i32, i32
  }
  func.func @transform_3(%arg0: i32) -> (i32, i32) {
    %c0_i32 = arith.constant 0 : i32
    %c0_i32_0 = arith.constant 0 : i32
    return %arg0, %c0_i32 : i32, i32
  }
}

</mosaic_0001>

<llo_original>
// kernel: _highway_forward_impl.1
$region0: #{_highway_forward_impl.1}
  #allocation0 [shape = 'u32[]', space=smem, size = 0x4, offset = 0x4, fixed_abs, tag = 'smem constant byte address 0x4 - core index']
  #allocation1 [shape = 'u32[144,128]{1,0:T(1,128)}', space=vmem, size = 0x12000, scoped, tag = 'internal scratch']
  %s0 = inlined_call_operand.vmem [shape: f32[16,128], index: 0, kind: input, shape index: {}]
  %s1 = inlined_call_operand.vmem [shape: f32[128,256], index: 1, kind: input, shape index: {}]
  %s2 = inlined_call_operand.vmem [shape: f32[1,256], index: 2, kind: input, shape index: {}]
  %s3 = inlined_call_operand.hbm [shape: f32[16,128], index: 3, kind: output, shape index: {}]
  %s4 = sld [smem:[#allocation0]]
  $region22: #{_highway_forward_impl.1} parent=0
    _
  %s6 = ssub.s32 1, %s4
  %s7 = scalar_select 0, %s6, %s4
  $region1: #{_highway_forward_impl.1} parent=0
    #allocation2 [shape = 'u8[8192]{0}', space=vmem, size = 0x2000, scoped, tag = 'output window, operand 0, single buffered']
    #allocation3 [shape = 's32[1]{0}', space=sflag, size = 0x4, scoped, tag = 'scoped memory for _highway_forward_impl.1']
    %8 = vsyncpa [#allocation3], 0
    // Predicated region
    $region2: #{_highway_forward_impl.1} parent=1 // pred_check
      _
    $region3: #{_highway_forward_impl.1} parent=1 // pred_check_branch
      %10 = sbr.rel (0) target = $region5
    $region4: #{_highway_forward_impl.1} parent=1 // pred_region
      _
    $region5: #{_highway_forward_impl.1} parent=1 // pred_fallthru
      _
    // Predicated region
    $region6: #{_highway_forward_impl.1} parent=1 // pred_check
      _
    $region7: #{_highway_forward_impl.1} parent=1 // pred_check_branch
      %12 = sbr.rel (0) target = $region9
    $region8: #{_highway_forward_impl.1} parent=1 // pred_region
      _
    $region9: #{_highway_forward_impl.1} parent=1 // pred_fallthru
      _
    // Predicated region
    $region10: #{_highway_forward_impl.1} parent=1 // pred_check
      _
    $region11: #{_highway_forward_impl.1} parent=1 // pred_check_branch
      %14 = sbr.rel (0) target = $region13
    $region12: #{_highway_forward_impl.1} parent=1 // pred_region
      _
    $region13: #{_highway_forward_impl.1} parent=1 // pred_fallthru
      _
    %v15 = vld [vmem:[%s0] sm:$0xff]
    %v16 = vld [vmem:[%s0 + $0x8] sm:$0xff]
    %v17 = vld [vmem:[%s1] sm:$0xff]
    %v18 = vld [vmem:[%s1 + $0x8] sm:$0xff]
    %v19 = vld [vmem:[%s1 + $0x10] sm:$0xff]
    %v20 = vld [vmem:[%s1 + $0x18] sm:$0xff]
    %v21 = vld [vmem:[%s1 + $0x20] sm:$0xff]
    %v22 = vld [vmem:[%s1 + $0x28] sm:$0xff]
    %v23 = vld [vmem:[%s1 + $0x30] sm:$0xff]
    %v24 = vld [vmem:[%s1 + $0x38] sm:$0xff]
    %v25 = vld [vmem:[%s1 + $0x40] sm:$0xff]
    %v26 = vld [vmem:[%s1 + $0x48] sm:$0xff]
    %v27 = vld [vmem:[%s1 + $0x50] sm:$0xff]
    %v28 = vld [vmem:[%s1 + $0x58] sm:$0xff]
    %v29 = vld [vmem:[%s1 + $0x60] sm:$0xff]
    %v30 = vld [vmem:[%s1 + $0x68] sm:$0xff]
    %v31 = vld [vmem:[%s1 + $0x70] sm:$0xff]
    %v32 = vld [vmem:[%s1 + $0x78] sm:$0xff]
    %v33 = vld [vmem:[%s1 + $0x80] sm:$0xff]
    %v34 = vld [vmem:[%s1 + $0x88] sm:$0xff]
    %v35 = vld [vmem:[%s1 + $0x90] sm:$0xff]
    %v36 = vld [vmem:[%s1 + $0x98] sm:$0xff]
    %v37 = vld [vmem:[%s1 + $0xa0] sm:$0xff]
    %v38 = vld [vmem:[%s1 + $0xa8] sm:$0xff]
    %v39 = vld [vmem:[%s1 + $0xb0] sm:$0xff]
    %v40 = vld [vmem:[%s1 + $0xb8] sm:$0xff]
    %v41 = vld [vmem:[%s1 + $0xc0] sm:$0xff]
    %v42 = vld [vmem:[%s1 + $0xc8] sm:$0xff]
    %v43 = vld [vmem:[%s1 + $0xd0] sm:$0xff]
    %v44 = vld [vmem:[%s1 + $0xd8] sm:$0xff]
    %v45 = vld [vmem:[%s1 + $0xe0] sm:$0xff]
    %v46 = vld [vmem:[%s1 + $0xe8] sm:$0xff]
    %v47 = vld [vmem:[%s1 + $0xf0] sm:$0xff]
    %v48 = vld [vmem:[%s1 + $0xf8] sm:$0xff]
    %v49 = vld [vmem:[%s2] sm:$0x3]
    %v51 = vlaneseq
    %v52 = vshrl.u32 %v51, 7
    %v53 = vsub.s32 0, %v52
    %v54 = vrot.slane %v49, %v53
    %v55 = vlaneseq
    %v56 = vshrl.u32 %v55, 7
    %v57 = vsub.s32 1, %v56
    %v58 = vrot.slane %v49, %v57
    %61 = vmatprep.subr.mxu0 %v18
    %62 = vmatpush1.msra.mxu0 %v17
    %63 = vmatprep.subr.mxu0 %v20
    %64 = vmatpush1.msra.mxu0 %v19
    %65 = vmatprep.subr.mxu0 %v22
    %66 = vmatpush1.msra.mxu0 %v21
    %67 = vmatprep.subr.mxu0 %v24
    %68 = vmatpush1.msra.mxu0 %v23
    %69 = vmatprep.subr.mxu0 %v26
    %70 = vmatpush1.msra.mxu0 %v25
    %71 = vmatprep.subr.mxu0 %v28
    %72 = vmatpush1.msra.mxu0 %v27
    %73 = vmatprep.subr.mxu0 %v30
    %74 = vmatpush1.msra.mxu0 %v29
    %75 = vmatprep.subr.mxu0 %v32
    %76 = vmatpush1.msra.mxu0 %v31
    %77 = vmatprep.subr.mxu0 %v34
    %78 = vmatpush1.msra.mxu0 %v33
    %79 = vmatprep.subr.mxu0 %v36
    %80 = vmatpush1.msra.mxu0 %v35
    %81 = vmatprep.subr.mxu0 %v38
    %82 = vmatpush1.msra.mxu0 %v37
    %83 = vmatprep.subr.mxu0 %v40
    %84 = vmatpush1.msra.mxu0 %v39
    %85 = vmatprep.subr.mxu0 %v42
    %86 = vmatpush1.msra.mxu0 %v41
    %87 = vmatprep.subr.mxu0 %v44
    %88 = vmatpush1.msra.mxu0 %v43
    %89 = vmatprep.subr.mxu0 %v46
    %90 = vmatpush1.msra.mxu0 %v45
    %91 = vmatprep.subr.mxu0 %v48
    %92 = vmatpush1.msra.mxu0 %v47
    %93 = vmatprep.subr.mxu0 0.0
    %94 = vmatpush1.msra.mxu0 0.0
    %95 = vmatprep.subr.mxu0 0.0
    %96 = vmatpush1.msra.mxu0 0.0
    %97 = vmatprep.subr.mxu0 0.0
    %98 = vmatpush1.msra.mxu0 0.0
    %99 = vmatprep.subr.mxu0 0.0
    %100 = vmatpush1.msra.mxu0 0.0
    %101 = vmatprep.subr.mxu0 0.0
    %102 = vmatpush1.msra.mxu0 0.0
    %103 = vmatprep.subr.mxu0 0.0
    %104 = vmatpush1.msra.mxu0 0.0
    %105 = vmatprep.subr.mxu0 0.0
    %106 = vmatpush1.msra.mxu0 0.0
    %107 = vmatprep.subr.mxu0 0.0
    %108 = vmatpush1.msra.mxu0 0.0
    %109 = vmatprep.subr.mxu0 0.0
    %110 = vmatpush1.msra.mxu0 0.0
    %111 = vmatprep.subr.mxu0 0.0
    %112 = vmatpush1.msra.mxu0 0.0
    %113 = vmatprep.subr.mxu0 0.0
    %114 = vmatpush1.msra.mxu0 0.0
    %115 = vmatprep.subr.mxu0 0.0
    %116 = vmatpush1.msra.mxu0 0.0
    %117 = vmatprep.subr.mxu0 0.0
    %118 = vmatpush1.msra.mxu0 0.0
    %119 = vmatprep.subr.mxu0 0.0
    %120 = vmatpush1.msra.mxu0 0.0
    %121 = vmatprep.subr.mxu0 0.0
    %122 = vmatpush1.msra.mxu0 0.0
    %123 = vmatprep.subr.mxu0 0.0
    %124 = vmatpush1.msra.mxu0 0.0
    %125 = vmatprep.mubr.f32.mxu0 0.0
    %126 = vmatmul.mubr.f32.gmra.mrb[0].mxu0 %v15
    %v127 = vpop.f32.mrb[0].mxu0
    %v128 = vadd.f32 %v54, %v127
    %v129 = vpop.f32.mrb[0].mxu0
    %v130 = vadd.f32 %v58, %v129
    %131 = vmatprep.mubr.f32.mxu0 0.0
    %132 = vmatmul.mubr.f32.gmra.mrb[0].mxu0 %v16
    %v133 = vpop.f32.mrb[0].mxu0
    %v134 = vadd.f32 %v54, %v133
    %v135 = vpop.f32.mrb[0].mxu0
    %v136 = vadd.f32 %v58, %v135
    %137 = vdwg.mxu0
    %v138 = vmax.f32 %v128, 0.0
    %v139 = vmax.f32 %v134, 0.0
    %v140 = vxor.u32 %v130, 2147483648
    %v141 = vxor.u32 %v136, 2147483648
    %v142 = vmul.f32 %v140, 1.442695
    %v143 = vpow.pop %v142
    %v144 = vmul.f32 %v141, 1.442695
    %v145 = vpow.pop %v144
    %v146 = vadd.f32 %v143, 1.0
    %v147 = vadd.f32 %v145, 1.0
    %v148 = vrcp.pop %v146
    %v149 = vmul.f32 1.0, %v148
    %v150 = vrcp.pop %v147
    %v151 = vmul.f32 1.0, %v150
    %v152 = vsub.f32 1.0, %v149
    %v153 = vsub.f32 1.0, %v151
    %v154 = vmul.f32 %v15, %v152
    %v155 = vmul.f32 %v16, %v153
    %v156 = vmul.f32 %v138, %v149
    %v157 = vmul.f32 %v139, %v151
    %v158 = vadd.f32 %v154, %v156
    %v159 = vadd.f32 %v155, %v157
    %160 = vst [vmem:[#allocation2] sm:$0xff] %v158
    %161 = vst [vmem:[#allocation2 + $0x8] sm:$0xff] %v159
    // Predicated region
    $region14: #{_highway_forward_impl.1} parent=1 // pred_check
      _
    $region15: #{_highway_forward_impl.1} parent=1 // pred_check_branch
      %163 = sbr.rel (0) target = $region17
    $region16: #{_highway_forward_impl.1} parent=1 // pred_region
      %s165 = ssub.s32 256, 256
      %166 = vsyncadd [#allocation3], %s165
      %s167 = sshll.u32 [#allocation2], 4
      %s168 = int_to_ptr.vmem [resolvable:$true] %s167
      %173 = dma.vmem_to_hbm [thread:$0]  %s168, 256, %s3, [#allocation3], 128, 128, 8
    $region17: #{_highway_forward_impl.1} parent=1 // pred_fallthru
      _
    // Predicated region
    $region18: #{_highway_forward_impl.1} parent=1 // pred_check
      _
    $region19: #{_highway_forward_impl.1} parent=1 // pred_check_branch
      %175 = sbr.rel (0) target = $region21
    $region20: #{_highway_forward_impl.1} parent=1 // pred_region
      %176 = dma.done [#allocation3], 256
    $region21: #{_highway_forward_impl.1} parent=1 // pred_fallthru
      _
    %177 = vsyncpa [#allocation3], 1

// kernel: _highway_forward_impl.1
$region0: #{_highway_forward_impl.1}
  #allocation0 [shape = 'u32[]', space=smem, size = 0x4, offset = 0x4, fixed_abs, tag = 'smem constant byte address 0x4 - core index']
  #allocation1 [shape = 'u32[144,128]{1,0:T(1,128)}', space=vmem, size = 0x12000, scoped, tag = 'internal scratch']
  %s0 = inlined_call_operand.vmem [shape: f32[16,128], index: 0, kind: input, shape index: {}]
  %s1 = inlined_call_operand.vmem [shape: f32[128,256], index: 1, kind: input, shape index: {}]
  %s2 = inlined_call_operand.vmem [shape: f32[1,256], index: 2, kind: input, shape index: {}]
  %s3 = inlined_call_operand.hbm [shape: f32[16,128], index: 3, kind: output, shape index: {}]
  %s4 = sld [smem:[#allocation0]]
  $region22: #{_highway_forward_impl.1} parent=0
    _
  %s6 = ssub.s32 1, %s4
  %s7 = scalar_select 0, %s6, %s4
  $region1: #{_highway_forward_impl.1} parent=0
    #allocation2 [shape = 'u8[8192]{0}', space=vmem, size = 0x2000, scoped, tag = 'output window, operand 0, single buffered']
    #allocation3 [shape = 's32[1]{0}', space=sflag, size = 0x4, scoped, tag = 'scoped memory for _highway_forward_impl.1']
    %8 = vsyncpa [#allocation3], 0
    // Predicated region
    $region2: #{_highway_forward_impl.1} parent=1 // pred_check
      _
    $region3: #{_highway_forward_impl.1} parent=1 // pred_check_branch
      %10 = sbr.rel (0) target = $region5
    $region4: #{_highway_forward_impl.1} parent=1 // pred_region
      _
    $region5: #{_highway_forward_impl.1} parent=1 // pred_fallthru
      _
    // Predicated region
    $region6: #{_highway_forward_impl.1} parent=1 // pred_check
      _
    $region7: #{_highway_forward_impl.1} parent=1 // pred_check_branch
      %12 = sbr.rel (0) target = $region9
    $region8: #{_highway_forward_impl.1} parent=1 // pred_region
      _
    $region9: #{_highway_forward_impl.1} parent=1 // pred_fallthru
      _
    // Predicated region
    $region10: #{_highway_forward_impl.1} parent=1 // pred_check
      _
    $region11: #{_highway_forward_impl.1} parent=1 // pred_check_branch
      %14 = sbr.rel (0) target = $region13
    $region12: #{_highway_forward_impl.1} parent=1 // pred_region
      _
    $region13: #{_highway_forward_impl.1} parent=1 // pred_fallthru
      _
    %v15 = vld [vmem:[%s0] sm:$0xff]
    %v16 = vld [vmem:[%s0 + $0x8] sm:$0xff]
    %v17 = vld [vmem:[%s1] sm:$0xff]
    %v18 = vld [vmem:[%s1 + $0x8] sm:$0xff]
    %v19 = vld [vmem:[%s1 + $0x10] sm:$0xff]
    %v20 = vld [vmem:[%s1 + $0x18] sm:$0xff]
    %v21 = vld [vmem:[%s1 + $0x20] sm:$0xff]
    %v22 = vld [vmem:[%s1 + $0x28] sm:$0xff]
    %v23 = vld [vmem:[%s1 + $0x30] sm:$0xff]
    %v24 = vld [vmem:[%s1 + $0x38] sm:$0xff]
    %v25 = vld [vmem:[%s1 + $0x40] sm:$0xff]
    %v26 = vld [vmem:[%s1 + $0x48] sm:$0xff]
    %v27 = vld [vmem:[%s1 + $0x50] sm:$0xff]
    %v28 = vld [vmem:[%s1 + $0x58] sm:$0xff]
    %v29 = vld [vmem:[%s1 + $0x60] sm:$0xff]
    %v30 = vld [vmem:[%s1 + $0x68] sm:$0xff]
    %v31 = vld [vmem:[%s1 + $0x70] sm:$0xff]
    %v32 = vld [vmem:[%s1 + $0x78] sm:$0xff]
    %v33 = vld [vmem:[%s1 + $0x80] sm:$0xff]
    %v34 = vld [vmem:[%s1 + $0x88] sm:$0xff]
    %v35 = vld [vmem:[%s1 + $0x90] sm:$0xff]
    %v36 = vld [vmem:[%s1 + $0x98] sm:$0xff]
    %v37 = vld [vmem:[%s1 + $0xa0] sm:$0xff]
    %v38 = vld [vmem:[%s1 + $0xa8] sm:$0xff]
    %v39 = vld [vmem:[%s1 + $0xb0] sm:$0xff]
    %v40 = vld [vmem:[%s1 + $0xb8] sm:$0xff]
    %v41 = vld [vmem:[%s1 + $0xc0] sm:$0xff]
    %v42 = vld [vmem:[%s1 + $0xc8] sm:$0xff]
    %v43 = vld [vmem:[%s1 + $0xd0] sm:$0xff]
    %v44 = vld [vmem:[%s1 + $0xd8] sm:$0xff]
    %v45 = vld [vmem:[%s1 + $0xe0] sm:$0xff]
    %v46 = vld [vmem:[%s1 + $0xe8] sm:$0xff]
    %v47 = vld [vmem:[%s1 + $0xf0] sm:$0xff]
    %v48 = vld [vmem:[%s1 + $0xf8] sm:$0xff]
    %v49 = vld [vmem:[%s2] sm:$0x3]
    %v51 = vlaneseq
    %v52 = vshrl.u32 %v51, 7
    %v53 = vsub.s32 0, %v52
    %v54 = vrot.slane %v49, %v53
    %v55 = vlaneseq
    %v56 = vshrl.u32 %v55, 7
    %v57 = vsub.s32 1, %v56
    %v58 = vrot.slane %v49, %v57
    %61 = vmatprep.subr.mxu0 %v18
    %62 = vmatpush1.msra.mxu0 %v17
    %63 = vmatprep.subr.mxu0 %v20
    %64 = vmatpush1.msra.mxu0 %v19
    %65 = vmatprep.subr.mxu0 %v22
    %66 = vmatpush1.msra.mxu0 %v21
    %67 = vmatprep.subr.mxu0 %v24
    %68 = vmatpush1.msra.mxu0 %v23
    %69 = vmatprep.subr.mxu0 %v26
    %70 = vmatpush1.msra.mxu0 %v25
    %71 = vmatprep.subr.mxu0 %v28
    %72 = vmatpush1.msra.mxu0 %v27
    %73 = vmatprep.subr.mxu0 %v30
    %74 = vmatpush1.msra.mxu0 %v29
    %75 = vmatprep.subr.mxu0 %v32
    %76 = vmatpush1.msra.mxu0 %v31
    %77 = vmatprep.subr.mxu0 %v34
    %78 = vmatpush1.msra.mxu0 %v33
    %79 = vmatprep.subr.mxu0 %v36
    %80 = vmatpush1.msra.mxu0 %v35
    %81 = vmatprep.subr.mxu0 %v38
    %82 = vmatpush1.msra.mxu0 %v37
    %83 = vmatprep.subr.mxu0 %v40
    %84 = vmatpush1.msra.mxu0 %v39
    %85 = vmatprep.subr.mxu0 %v42
    %86 = vmatpush1.msra.mxu0 %v41
    %87 = vmatprep.subr.mxu0 %v44
    %88 = vmatpush1.msra.mxu0 %v43
    %89 = vmatprep.subr.mxu0 %v46
    %90 = vmatpush1.msra.mxu0 %v45
    %91 = vmatprep.subr.mxu0 %v48
    %92 = vmatpush1.msra.mxu0 %v47
    %93 = vmatprep.subr.mxu0 0.0
    %94 = vmatpush1.msra.mxu0 0.0
    %95 = vmatprep.subr.mxu0 0.0
    %96 = vmatpush1.msra.mxu0 0.0
    %97 = vmatprep.subr.mxu0 0.0
    %98 = vmatpush1.msra.mxu0 0.0
    %99 = vmatprep.subr.mxu0 0.0
    %100 = vmatpush1.msra.mxu0 0.0
    %101 = vmatprep.subr.mxu0 0.0
    %102 = vmatpush1.msra.mxu0 0.0
    %103 = vmatprep.subr.mxu0 0.0
    %104 = vmatpush1.msra.mxu0 0.0
    %105 = vmatprep.subr.mxu0 0.0
    %106 = vmatpush1.msra.mxu0 0.0
    %107 = vmatprep.subr.mxu0 0.0
    %108 = vmatpush1.msra.mxu0 0.0
    %109 = vmatprep.subr.mxu0 0.0
    %110 = vmatpush1.msra.mxu0 0.0
    %111 = vmatprep.subr.mxu0 0.0
    %112 = vmatpush1.msra.mxu0 0.0
    %113 = vmatprep.subr.mxu0 0.0
    %114 = vmatpush1.msra.mxu0 0.0
    %115 = vmatprep.subr.mxu0 0.0
    %116 = vmatpush1.msra.mxu0 0.0
    %117 = vmatprep.subr.mxu0 0.0
    %118 = vmatpush1.msra.mxu0 0.0
    %119 = vmatprep.subr.mxu0 0.0
    %120 = vmatpush1.msra.mxu0 0.0
    %121 = vmatprep.subr.mxu0 0.0
    %122 = vmatpush1.msra.mxu0 0.0
    %123 = vmatprep.subr.mxu0 0.0
    %124 = vmatpush1.msra.mxu0 0.0
    %125 = vmatprep.mubr.f32.mxu0 0.0
    %126 = vmatmul.mubr.f32.gmra.mrb[0].mxu0 %v15
    %v127 = vpop.f32.mrb[0].mxu0
    %v128 = vadd.f32 %v54, %v127
    %v129 = vpop.f32.mrb[0].mxu0
    %v130 = vadd.f32 %v58, %v129
    %131 = vmatprep.mubr.f32.mxu0 0.0
    %132 = vmatmul.mubr.f32.gmra.mrb[0].mxu0 %v16
    %v133 = vpop.f32.mrb[0].mxu0
    %v134 = vadd.f32 %v54, %v133
    %v135 = vpop.f32.mrb[0].mxu0
    %v136 = vadd.f32 %v58, %v135
    %137 = vdwg.mxu0
    %v138 = vmax.f32 %v128, 0.0
    %v139 = vmax.f32 %v134, 0.0
    %v140 = vxor.u32 %v130, 2147483648
    %v141 = vxor.u32 %v136, 2147483648
    %v142 = vmul.f32 %v140, 1.442695
    %v143 = vpow.pop %v142
    %v144 = vmul.f32 %v141, 1.442695
    %v145 = vpow.pop %v144
    %v146 = vadd.f32 %v143, 1.0
    %v147 = vadd.f32 %v145, 1.0
    %v148 = vrcp.pop %v146
    %v149 = vmul.f32 1.0, %v148
    %v150 = vrcp.pop %v147
    %v151 = vmul.f32 1.0, %v150
    %v152 = vsub.f32 1.0, %v149
    %v153 = vsub.f32 1.0, %v151
    %v154 = vmul.f32 %v15, %v152
    %v155 = vmul.f32 %v16, %v153
    %v156 = vmul.f32 %v138, %v149
    %v157 = vmul.f32 %v139, %v151
    %v158 = vadd.f32 %v154, %v156
    %v159 = vadd.f32 %v155, %v157
    %160 = vst [vmem:[#allocation2] sm:$0xff] %v158
    %161 = vst [vmem:[#allocation2 + $0x8] sm:$0xff] %v159
    // Predicated region
    $region14: #{_highway_forward_impl.1} parent=1 // pred_check
      _
    $region15: #{_highway_forward_impl.1} parent=1 // pred_check_branch
      %163 = sbr.rel (0) target = $region17
    $region16: #{_highway_forward_impl.1} parent=1 // pred_region
      %s165 = ssub.s32 256, 256
      %166 = vsyncadd [#allocation3], %s165
      %s167 = sshll.u32 [#allocation2], 4
      %s168 = int_to_ptr.vmem [resolvable:$true] %s167
      %173 = dma.vmem_to_hbm [thread:$0]  %s168, 256, %s3, [#allocation3], 128, 128, 8
    $region17: #{_highway_forward_impl.1} parent=1 // pred_fallthru
      _
    // Predicated region
    $region18: #{_highway_forward_impl.1} parent=1 // pred_check
      _
    $region19: #{_highway_forward_impl.1} parent=1 // pred_check_branch
      %175 = sbr.rel (0) target = $region21
    $region20: #{_highway_forward_impl.1} parent=1 // pred_region
      %176 = dma.done [#allocation3], 256
    $region21: #{_highway_forward_impl.1} parent=1 // pred_fallthru
      _
    %177 = vsyncpa [#allocation3], 1

</llo_original>
